<compile_context>
chip_gen: v6e
topology: v6e:2x2x1
jax: 0.10.0
libtpu: 0.0.40
codegen_flags: <defaults>
</compile_context>

<pallas_src>
import functools

import jax
import jax.numpy as jnp
from jax.experimental import pallas as pl
from jax.experimental.pallas import tpu as pltpu


def _round_up(x, m):
    return (x + m - 1) // m * m


# ----------------------------- Pallas kernel ------------------------------

def _attention_gate_kernel(g_ref, x_ref, wg_ref, wx_ref, b_ref, wp_ref,
                           bp_ref, o_ref):
    # g_ref : (Bt, F_g, TP)    x_ref : (Bt, F_l, TP)   pixels on the lane axis
    # wg_ref: (F_int, F_g)     wx_ref: (F_int, F_l)    (storage/compute dtype)
    # b_ref : (F_int, 1) f32   wp_ref: (1, F_int)      bp_ref: (1, 1) f32
    # o_ref : (Bt, F_l, TP)
    wg = wg_ref[...]
    wx = wx_ref[...]
    wp = wp_ref[...]
    b = b_ref[...]
    bp = bp_ref[...]

    bt = g_ref.shape[0]
    for bi in range(bt):                        # small static unroll over batch
        gb = g_ref[bi]                          # (F_g, TP)
        xb = x_ref[bi]                          # (F_l, TP)
        acc = jnp.dot(wg, gb, preferred_element_type=jnp.float32)
        acc = acc + jnp.dot(wx, xb, preferred_element_type=jnp.float32)
        a = jnp.maximum(acc + b, 0.0)           # (F_int, TP), f32
        logit = jnp.dot(wp, a.astype(wp.dtype),
                        preferred_element_type=jnp.float32) + bp
        psi = jax.nn.sigmoid(logit)             # (1, TP), f32
        o_ref[bi] = (xb.astype(jnp.float32) * psi).astype(o_ref.dtype)


# ------------------------------ Tile planning ------------------------------

def _plan_tiles(N, P, F_g, F_l, itemsize):
    """Pick (Bt, pixel tile, vmem_limit) from the running chip's VMEM size."""
    try:
        vmem_cap = int(pltpu.get_tpu_info().vmem_capacity_bytes)
    except Exception:                            # conservative v7x-safe default
        vmem_cap = 64 << 20
    budget = vmem_cap // 2                       # for double-buffered g/x/out

    sub = max(8, 32 // itemsize)                 # sublane granularity (8 f32, 16 bf16)
    fg_p = _round_up(F_g, sub)
    fl_p = _round_up(F_l, sub)
    per_px = 2 * (fg_p + 2 * fl_p) * itemsize    # 2x-buffered g, x, out per pixel

    p_lanes = _round_up(P, 128)
    tp_max = max(128, (budget // max(per_px, 1)) // 128 * 128)

    if p_lanes <= tp_max:
        tp = P                                   # single full-extent pixel tile
    else:
        # Smallest tile count whose multiple-of-128 tile evenly covers the
        # lane-rounded pixel axis -> no ragged last tile (unmasked stores).
        n_tiles = pl.cdiv(p_lanes, tp_max)
        while (p_lanes % n_tiles) or ((p_lanes // n_tiles) % 128):
            n_tiles += 1
        tp = p_lanes // n_tiles
    px_tiles = pl.cdiv(P, tp)

    # Small images: batch a few images per grid step to amortize step overhead.
    bt = 1
    if px_tiles == 1 and N > 1:
        bt = max(1, min(N, 8, budget // max(per_px * tp, 1)))
        while N % bt:                            # keep batch tiles dense
            bt -= 1

    # v7x has 2 TensorCores sharing the "parallel" grid: keep >= 2 grid steps.
    if (N // bt) * px_tiles < 2:
        if bt > 1:
            bt_new = bt // 2
            while bt_new > 1 and N % bt_new:
                bt_new -= 1
            bt = max(1, bt_new)
        elif px_tiles == 1 and P % 256 == 0:
            tp = P // 2

    data_bytes = 2 * bt * (fg_p + 2 * fl_p) * _round_up(tp, 128) * itemsize
    need = data_bytes + (4 << 20)                # weights + compiler headroom
    vmem_limit = int(min(max(need, 32 << 20), int(vmem_cap * 0.9)))
    return int(bt), int(tp), vmem_limit


# ------------------------------ pallas_call --------------------------------

def _attention_gate_nchw(g3, x3, wg, wx, b_gx, wp, bp, *, bt, tp, vmem_limit,
                         out_dtype):
    """g3: (N, F_g, P), x3: (N, F_l, P) -> (N, F_l, P)."""
    N, F_g, P = g3.shape
    F_l = x3.shape[1]
    F_int = wg.shape[0]

    grid = (pl.cdiv(N, bt), pl.cdiv(P, tp))

    return pl.pallas_call(
        _attention_gate_kernel,
        out_shape=jax.ShapeDtypeStruct((N, F_l, P), out_dtype),
        grid_spec=pltpu.PrefetchScalarGridSpec(
            num_scalar_prefetch=0,
            grid=grid,
            in_specs=[
                pl.BlockSpec((bt, F_g, tp), lambda b, p: (b, 0, p)),
                pl.BlockSpec((bt, F_l, tp), lambda b, p: (b, 0, p)),
                # Constant-index operands: fetched once, never re-DMA'd.
                pl.BlockSpec((F_int, F_g), lambda b, p: (0, 0)),
                pl.BlockSpec((F_int, F_l), lambda b, p: (0, 0)),
                pl.BlockSpec((F_int, 1), lambda b, p: (0, 0)),
                pl.BlockSpec((1, F_int), lambda b, p: (0, 0)),
                pl.BlockSpec((1, 1), lambda b, p: (0, 0)),
            ],
            out_specs=pl.BlockSpec((bt, F_l, tp), lambda b, p: (b, 0, p)),
        ),
        compiler_params=pltpu.CompilerParams(
            dimension_semantics=("parallel", "parallel"),
            vmem_limit_bytes=vmem_limit),
    )(g3, x3, wg, wx, b_gx, wp, bp)


# ------------------------------ Module glue -------------------------------

def _fold_bn(w, b, gamma, beta, mean, var, eps=1e-5):
    """Fold eval-mode BatchNorm2d into a preceding 1x1 conv.

    w: (C_out, C_in), b: (C_out,). Returns w_f (C_out, C_in), b_f (C_out, 1).
    """
    scale = gamma / jnp.sqrt(var + eps)
    w_f = w * scale[:, None]
    b_f = (b - mean) * scale + beta
    return w_f, b_f[:, None]


def init_attention_block_params(key, F_g, F_l, F_int):
    """Deterministic synthetic parameters (conv + BN for W_g, W_x, psi)."""
    ks = jax.random.split(key, 12)
    p = {}
    p["wg_w"] = 0.2 * jax.random.normal(ks[0], (F_int, F_g), jnp.float32)
    p["wg_b"] = 0.1 * jax.random.normal(ks[1], (F_int,), jnp.float32)
    p["wg_gamma"] = 1.0 + 0.1 * jax.random.normal(ks[2], (F_int,), jnp.float32)
    p["wg_beta"] = 0.1 * jax.random.normal(ks[3], (F_int,), jnp.float32)
    p["wg_mean"] = 0.05 * jax.random.normal(ks[4], (F_int,), jnp.float32)
    p["wg_var"] = 1.0 + 0.1 * jax.random.uniform(ks[5], (F_int,), jnp.float32)
    p["wx_w"] = 0.2 * jax.random.normal(ks[6], (F_int, F_l), jnp.float32)
    p["wx_b"] = 0.1 * jax.random.normal(ks[7], (F_int,), jnp.float32)
    p["wx_gamma"] = 1.0 + 0.1 * jax.random.normal(ks[8], (F_int,), jnp.float32)
    p["wx_beta"] = 0.1 * jax.random.normal(ks[9], (F_int,), jnp.float32)
    p["wx_mean"] = 0.05 * jax.random.normal(ks[10], (F_int,), jnp.float32)
    p["wx_var"] = 1.0 + 0.1 * jax.random.uniform(ks[11], (F_int,), jnp.float32)
    kp = jax.random.split(jax.random.fold_in(key, 123), 6)
    p["wp_w"] = 0.3 * jax.random.normal(kp[0], (1, F_int), jnp.float32)
    p["wp_b"] = 0.1 * jax.random.normal(kp[1], (1,), jnp.float32)
    p["wp_gamma"] = 1.0 + 0.1 * jax.random.normal(kp[2], (1,), jnp.float32)
    p["wp_beta"] = 0.1 * jax.random.normal(kp[3], (1,), jnp.float32)
    p["wp_mean"] = 0.05 * jax.random.normal(kp[4], (1,), jnp.float32)
    p["wp_var"] = 1.0 + 0.1 * jax.random.uniform(kp[5], (1,), jnp.float32)
    return p


@functools.partial(jax.jit, static_argnames=("compute_dtype",))
def attention_block_forward(g, x, params, *, compute_dtype=None):
    """g: (N, F_g, H, W), x: (N, F_l, H, W) -> (N, F_l, H, W).

    Eval-mode BatchNorm (running stats) folded into the 1x1 convolutions.
    Activations/weights are stored in `compute_dtype` (default: x.dtype, ideally
    bf16); all matmul accumulation and the sigmoid stay in f32.
    """
    N, F_g, H, W = g.shape
    F_l = x.shape[1]
    P = H * W
    cdt = jnp.dtype(compute_dtype) if compute_dtype is not None else x.dtype

    wg, bg = _fold_bn(params["wg_w"], params["wg_b"], params["wg_gamma"],
                      params["wg_beta"], params["wg_mean"], params["wg_var"])
    wx, bx = _fold_bn(params["wx_w"], params["wx_b"], params["wx_gamma"],
                      params["wx_beta"], params["wx_mean"], params["wx_var"])
    wp, bp = _fold_bn(params["wp_w"], params["wp_b"], params["wp_gamma"],
                      params["wp_beta"], params["wp_mean"], params["wp_var"])
    b_gx = (bg + bx).astype(jnp.float32)          # pre-summed projection bias
    bp = bp.astype(jnp.float32)
    wg = wg.astype(cdt)
    wx = wx.astype(cdt)
    wp = wp.astype(cdt)

    g3 = g.reshape(N, F_g, P).astype(cdt)         # free reshape (NCHW layout)
    x3 = x.reshape(N, F_l, P).astype(cdt)

    bt, tp, vmem_limit = _plan_tiles(N, P, F_g, F_l, cdt.itemsize)
    out3 = _attention_gate_nchw(g3, x3, wg, wx, b_gx, wp, bp,
                                bt=bt, tp=tp, vmem_limit=vmem_limit,
                                out_dtype=cdt)
    return out3.reshape(N, F_l, H, W)


# Pure-JAX reference for a correctness check.
def _reference(g, x, params):
    def branch(inp, w, b, gamma, beta, mean, var, eps=1e-5):
        y = jnp.einsum("nchw,oc->nohw", inp.astype(jnp.float32), w) \
            + b[None, :, None, None]
        scale = gamma / jnp.sqrt(var + eps)
        return (y - mean[None, :, None, None]) * scale[None, :, None, None] \
            + beta[None, :, None, None]

    g1 = branch(g, params["wg_w"], params["wg_b"], params["wg_gamma"],
                params["wg_beta"], params["wg_mean"], params["wg_var"])
    x1 = branch(x, params["wx_w"], params["wx_b"], params["wx_gamma"],
                params["wx_beta"], params["wx_mean"], params["wx_var"])
    a = jnp.maximum(g1 + x1, 0.0)
    logit = branch(a, params["wp_w"], params["wp_b"], params["wp_gamma"],
                   params["wp_beta"], params["wp_mean"], params["wp_var"])
    psi = jax.nn.sigmoid(logit)
    return x.astype(jnp.float32) * psi


if __name__ == "__main__":
    N, F_g, F_l, F_int, H, W = 2, 8, 8, 4, 16, 16

    key = jax.random.PRNGKey(0)
    kg, kx, kp = jax.random.split(key, 3)
    # bf16 activations (what a bf16 model would feed this block).
    g = jax.random.normal(kg, (N, F_g, H, W), jnp.float32).astype(jnp.bfloat16)
    x = jax.random.normal(kx, (N, F_l, H, W), jnp.float32).astype(jnp.bfloat16)
    params = init_attention_block_params(kp, F_g, F_l, F_int)

    out = attention_block_forward(g, x, params)
    out = jax.block_until_ready(out)

    ref = _reference(g, x, params)
    assert out.shape == (N, F_l, H, W)
    assert out.dtype == jnp.bfloat16
    assert jnp.allclose(out.astype(jnp.float32), ref, atol=5e-2, rtol=5e-2), \
        "mismatch vs reference"

    print("KERNEL_OK")
</pallas_src>

<mosaic_0001>
module attributes {stable_mosaic.version = 11 : i64} {
  func.func @_attention_gate_kernel(%arg0: i32, %arg1: i32, %arg2: memref<1x8x256xbf16, #tpu.memory_space<vmem>>, %arg3: memref<1x8x256xbf16, #tpu.memory_space<vmem>>, %arg4: memref<4x8xbf16, #tpu.memory_space<vmem>>, %arg5: memref<4x8xbf16, #tpu.memory_space<vmem>>, %arg6: memref<4x1xf32, #tpu.memory_space<vmem>>, %arg7: memref<1x4xbf16, #tpu.memory_space<vmem>>, %arg8: memref<1x1xf32, #tpu.memory_space<vmem>>, %arg9: memref<1x8x256xbf16, #tpu.memory_space<vmem>>) attributes {dimension_semantics = [#tpu.dimension_semantics<parallel>, #tpu.dimension_semantics<parallel>], iteration_bounds = array<i64: 2, 1>, scalar_prefetch = 0 : i64, scratch_operands = 0 : i64, tpu.core_type = #tpu.core_type<tc>, window_params = [{transform_indices = @transform_0, window_bounds = array<i64: 1, 8, 256>}, {transform_indices = @transform_1, window_bounds = array<i64: 1, 8, 256>}, {pipeline_mode = #tpu.pipeline_mode<synchronous>, transform_indices = @transform_2, window_bounds = array<i64: 4, 8>}, {pipeline_mode = #tpu.pipeline_mode<synchronous>, transform_indices = @transform_3, window_bounds = array<i64: 4, 8>}, {pipeline_mode = #tpu.pipeline_mode<synchronous>, transform_indices = @transform_4, window_bounds = array<i64: 4, 1>}, {pipeline_mode = #tpu.pipeline_mode<synchronous>, transform_indices = @transform_5, window_bounds = array<i64: 1, 4>}, {pipeline_mode = #tpu.pipeline_mode<synchronous>, transform_indices = @transform_6, window_bounds = array<i64: 1, 1>}, {transform_indices = @transform_7, window_bounds = array<i64: 1, 8, 256>}]} {
    %c0 = arith.constant 0 : index
    %c0_0 = arith.constant 0 : index
    %0 = vector.load %arg4[%c0, %c0_0] : memref<4x8xbf16, #tpu.memory_space<vmem>>, vector<4x8xbf16>
    %c0_1 = arith.constant 0 : index
    %c0_2 = arith.constant 0 : index
    %1 = vector.load %arg5[%c0_1, %c0_2] : memref<4x8xbf16, #tpu.memory_space<vmem>>, vector<4x8xbf16>
    %c0_3 = arith.constant 0 : index
    %c0_4 = arith.constant 0 : index
    %2 = vector.load %arg7[%c0_3, %c0_4] : memref<1x4xbf16, #tpu.memory_space<vmem>>, vector<1x4xbf16>
    %c0_5 = arith.constant 0 : index
    %c0_6 = arith.constant 0 : index
    %3 = vector.load %arg6[%c0_5, %c0_6] : memref<4x1xf32, #tpu.memory_space<vmem>>, vector<4x1xf32>
    %c0_7 = arith.constant 0 : index
    %c0_8 = arith.constant 0 : index
    %4 = vector.load %arg8[%c0_7, %c0_8] : memref<1x1xf32, #tpu.memory_space<vmem>>, vector<1x1xf32>
    %c0_9 = arith.constant 0 : index
    %c0_10 = arith.constant 0 : index
    %c0_11 = arith.constant 0 : index
    %5 = vector.load %arg2[%c0_9, %c0_10, %c0_11] : memref<1x8x256xbf16, #tpu.memory_space<vmem>>, vector<1x8x256xbf16>
    %6 = vector.shape_cast %5 : vector<1x8x256xbf16> to vector<8x256xbf16>
    %c0_12 = arith.constant 0 : index
    %c0_13 = arith.constant 0 : index
    %c0_14 = arith.constant 0 : index
    %7 = vector.load %arg3[%c0_12, %c0_13, %c0_14] : memref<1x8x256xbf16, #tpu.memory_space<vmem>>, vector<1x8x256xbf16>
    %8 = vector.shape_cast %7 : vector<1x8x256xbf16> to vector<8x256xbf16>
    %cst = arith.constant dense<0.000000e+00> : vector<4x256xf32>
    %9 = tpu.matmul %0, %6, %cst {dimension_numbers = #tpu.dot_dimension_numbers<[1], [0], [0], [1], [0, 0, 1, 1], [], []>} : vector<4x8xbf16>, vector<8x256xbf16>, vector<4x256xf32> -> vector<4x256xf32>
    %cst_15 = arith.constant dense<0.000000e+00> : vector<4x256xf32>
    %10 = tpu.matmul %1, %8, %cst_15 {dimension_numbers = #tpu.dot_dimension_numbers<[1], [0], [0], [1], [0, 0, 1, 1], [], []>} : vector<4x8xbf16>, vector<8x256xbf16>, vector<4x256xf32> -> vector<4x256xf32>
    %11 = arith.addf %9, %10 : vector<4x256xf32>
    %12 = vector.broadcast %3 : vector<4x1xf32> to vector<4x256xf32>
    %13 = arith.addf %11, %12 : vector<4x256xf32>
    %cst_16 = arith.constant 0.000000e+00 : f32
    %14 = vector.broadcast %cst_16 : f32 to vector<4x256xf32>
    %15 = arith.maximumf %13, %14 : vector<4x256xf32>
    %16 = arith.truncf %15 : vector<4x256xf32> to vector<4x256xbf16>
    %cst_17 = arith.constant dense<0.000000e+00> : vector<1x256xf32>
    %17 = tpu.matmul %2, %16, %cst_17 {dimension_numbers = #tpu.dot_dimension_numbers<[1], [0], [0], [1], [0, 0, 1, 1], [], []>} : vector<1x4xbf16>, vector<4x256xbf16>, vector<1x256xf32> -> vector<1x256xf32>
    %18 = vector.broadcast %4 : vector<1x1xf32> to vector<1x256xf32>
    %19 = arith.addf %17, %18 : vector<1x256xf32>
    %20 = arith.negf %19 : vector<1x256xf32>
    %21 = math.exp %20 : vector<1x256xf32>
    %cst_18 = arith.constant 1.000000e+00 : f32
    %22 = vector.broadcast %cst_18 : f32 to vector<1x256xf32>
    %23 = arith.addf %22, %21 : vector<1x256xf32>
    %24 = arith.divf %22, %23 : vector<1x256xf32>
    %25 = arith.extf %8 : vector<8x256xbf16> to vector<8x256xf32>
    %26 = vector.broadcast %24 : vector<1x256xf32> to vector<8x256xf32>
    %27 = arith.mulf %25, %26 : vector<8x256xf32>
    %28 = arith.truncf %27 : vector<8x256xf32> to vector<8x256xbf16>
    %c0_19 = arith.constant 0 : index
    %c0_20 = arith.constant 0 : index
    %c0_21 = arith.constant 0 : index
    %29 = vector.load %arg9[%c0_19, %c0_20, %c0_21] : memref<1x8x256xbf16, #tpu.memory_space<vmem>>, vector<1x8x256xbf16>
    %30 = vector.shape_cast %29 : vector<1x8x256xbf16> to vector<8x256xbf16>
    %31 = vector.shape_cast %28 : vector<8x256xbf16> to vector<1x8x256xbf16>
    tpu.vector_store %arg9[%c0_19, %c0_20, %c0_21], %31 {strides = array<i32>} : memref<1x8x256xbf16, #tpu.memory_space<vmem>>, vector<1x8x256xbf16>,
    return
  }
  func.func @transform_0(%arg0: i32, %arg1: i32) -> (i32, i32, i32) {
    %c0_i32 = arith.constant 0 : i32
    %c0_i32_0 = arith.constant 0 : i32
    return %arg0, %c0_i32, %arg1 : i32, i32, i32
  }
  func.func @transform_1(%arg0: i32, %arg1: i32) -> (i32, i32, i32) {
    %c0_i32 = arith.constant 0 : i32
    %c0_i32_0 = arith.constant 0 : i32
    return %arg0, %c0_i32, %arg1 : i32, i32, i32
  }
  func.func @transform_2(%arg0: i32, %arg1: i32) -> (i32, i32) {
    %c0_i32 = arith.constant 0 : i32
    %c0_i32_0 = arith.constant 0 : i32
    %c0_i32_1 = arith.constant 0 : i32
    return %c0_i32, %c0_i32_0 : i32, i32
  }
  func.func @transform_3(%arg0: i32, %arg1: i32) -> (i32, i32) {
    %c0_i32 = arith.constant 0 : i32
    %c0_i32_0 = arith.constant 0 : i32
    %c0_i32_1 = arith.constant 0 : i32
    return %c0_i32, %c0_i32_0 : i32, i32
  }
  func.func @transform_4(%arg0: i32, %arg1: i32) -> (i32, i32) {
    %c0_i32 = arith.constant 0 : i32
    %c0_i32_0 = arith.constant 0 : i32
    %c0_i32_1 = arith.constant 0 : i32
    return %c0_i32, %c0_i32_0 : i32, i32
  }
  func.func @transform_5(%arg0: i32, %arg1: i32) -> (i32, i32) {
    %c0_i32 = arith.constant 0 : i32
    %c0_i32_0 = arith.constant 0 : i32
    %c0_i32_1 = arith.constant 0 : i32
    return %c0_i32, %c0_i32_0 : i32, i32
  }
  func.func @transform_6(%arg0: i32, %arg1: i32) -> (i32, i32) {
    %c0_i32 = arith.constant 0 : i32
    %c0_i32_0 = arith.constant 0 : i32
    %c0_i32_1 = arith.constant 0 : i32
    return %c0_i32, %c0_i32_0 : i32, i32
  }
  func.func @transform_7(%arg0: i32, %arg1: i32) -> (i32, i32, i32) {
    %c0_i32 = arith.constant 0 : i32
    %c0_i32_0 = arith.constant 0 : i32
    return %arg0, %c0_i32, %arg1 : i32, i32, i32
  }
}

</mosaic_0001>

<llo_original>
// kernel: attention_block_forward.1
$region0: #{attention_block_forward.1}
  #allocation0 [shape = 'u32[]', space=smem, size = 0x4, offset = 0x4, fixed_abs, tag = 'smem constant byte address 0x4 - core index']
  #allocation1 [shape = 'u32[144,128]{1,0:T(1,128)}', space=vmem, size = 0x12000, scoped, tag = 'internal scratch']
  #allocation2 [shape = 'f32[1,1]{1,0:T(1,128)S(1)}', space=vmem, size = 0x200, scoped, tag = 'scoped memory for attention_block_forward.1']
  %s0 = inlined_call_operand.vmem [shape: bf16[2,8,256], index: 0, kind: input, shape index: {}]
  %s1 = inlined_call_operand.vmem [shape: bf16[2,8,256], index: 1, kind: input, shape index: {}]
  %s2 = inlined_call_operand.vmem [shape: bf16[4,8], index: 2, kind: input, shape index: {}]
  %s3 = inlined_call_operand.vmem [shape: bf16[4,8], index: 3, kind: input, shape index: {}]
  %s4 = inlined_call_operand.vmem [shape: f32[4,1], index: 4, kind: input, shape index: {}]
  %s5 = inlined_call_operand.vmem [shape: bf16[1,4], index: 5, kind: input, shape index: {}]
  %s6 = inlined_call_operand.<no memory space> [shape: f32[1,1], index: 6, kind: input, shape index: {}]
  %s7 = inlined_call_operand.vmem [shape: bf16[2,8,256], index: 7, kind: output, shape index: {}]
  %s8 = sld [smem:[#allocation0]]
  $region61: #{attention_block_forward.1} parent=0
    _
  %s10 = ssub.s32 1, %s8
  %s11 = scalar_select 0, %s10, %s8
  %v12 = vstv %s6
  %13 = vst [vmem:[#allocation2] sm:$0x1] %v12
  loop: start=0, step=1, limit=4
  $region2: #{attention_block_forward.1} parent=0 // loop_pre_header
    _
  $region3: #{attention_block_forward.1} parent=0 // loop_header
    %s15 = sphi 0, %s19
    %p16 = scmp.ge.s32.totalorder %s15, 4
    %s22 = sphi 0, %s34
    %s23 = sphi 0, %s30
    %s24 = sphi 0, %s22
    %s25 = sphi 0, %s23
    %s26 = sphi 0, %s24
    %s27 = sphi 0, %s25
    %s39 = sphi 0, %s41
    %s42 = sphi 0, %s39
    %s43 = sphi 0, %s42
    %s59 = sphi 0, %s43
    %s67 = sphi 0, %s69
    %s70 = sphi 0, %s67
    %s71 = sphi 0, %s70
    %s87 = sphi 0, %s71
    %s91 = sphi 0, %s91
    %s93 = sphi 0, %s91
    %s94 = sphi 0, %s93
    %s108 = sphi 0, %s94
    %s112 = sphi 0, %s112
    %s114 = sphi 0, %s112
    %s115 = sphi 0, %s114
    %s129 = sphi 0, %s115
    %s133 = sphi 0, %s133
    %s135 = sphi 0, %s133
    %s136 = sphi 0, %s135
    %s150 = sphi 0, %s136
    %s154 = sphi 0, %s154
    %s156 = sphi 0, %s154
    %s157 = sphi 0, %s156
    %s171 = sphi 0, %s157
    %s175 = sphi 0, %s175
    %s177 = sphi 0, %s175
    %s178 = sphi 0, %s177
    %s192 = sphi 0, %s178
    %s200 = sphi 0, %s202
    %s203 = sphi 0, %s200
    %s204 = sphi 0, %s203
    %s220 = sphi 0, %s204
  $region4: #{attention_block_forward.1} parent=0 // loop_header_branch
    %18 = sbr.rel (%p16) target = $region8
  $region5: #{attention_block_forward.1} parent=0 // loop_body
    %s20 = ssub.s32 %s15, 1
    %s21 = ssub.s32 %s15, 2
    %s28 = sadd.s32 1, %s23
    %p29 = scmp.ge.s32.totalorder %s28, 1
    %s30 = scalar_select %p29, 0, %s28
    %s31 = sadd.s32 1, %s22
    %s32 = scalar_select %p29, %s31, %s22
    %p33 = scmp.ge.s32.totalorder %s32, 2
    %s34 = scalar_select %p33, 0, %s32
    %s35 = ssub.s32 %s22, %s34
    %s36 = ssub.s32 %s23, %s30
    %s37 = sor.u32 %s35, %s36
    %p38 = scmp.eq.s32.totalorder %s37, 0
    %s40 = sadd.s32 %s39, 1
    %s41 = scalar_select %p38, %s39, %s40
    %p44 = pneg %p38
    %p45 = scmp.eq.s32.totalorder %s15, 1
    %p46 = por %p44, %p45
    %p47 = scmp.ne.s32.totalorder %s39, %s42
    %p48 = scmp.eq.s32.totalorder %s15, 0
    %p49 = por %p47, %p48
    %p50 = scmp.ne.s32.totalorder %s39, %s42
    %p51 = scmp.eq.s32.totalorder %s20, 1
    %p52 = por %p50, %p51
    %p53 = scmp.ne.s32.totalorder %s42, %s43
    %p54 = scmp.eq.s32.totalorder %s20, 0
    %p55 = por %p53, %p54
    %p56 = scmp.ne.s32.totalorder %s42, %s43
    %p57 = scmp.eq.s32.totalorder %s21, 1
    %p58 = por %p56, %p57
    %p60 = scmp.ne.s32.totalorder %s43, %s59
    %p61 = scmp.eq.s32.totalorder %s21, 0
    %p62 = por %p60, %p61
    %s63 = ssub.s32 %s22, %s34
    %s64 = ssub.s32 %s23, %s30
    %s65 = sor.u32 %s63, %s64
    %p66 = scmp.eq.s32.totalorder %s65, 0
    %s68 = sadd.s32 %s67, 1
    %s69 = scalar_select %p66, %s67, %s68
    %p72 = pneg %p66
    %p73 = scmp.eq.s32.totalorder %s15, 1
    %p74 = por %p72, %p73
    %p75 = scmp.ne.s32.totalorder %s67, %s70
    %p76 = scmp.eq.s32.totalorder %s15, 0
    %p77 = por %p75, %p76
    %p78 = scmp.ne.s32.totalorder %s67, %s70
    %p79 = scmp.eq.s32.totalorder %s20, 1
    %p80 = por %p78, %p79
    %p81 = scmp.ne.s32.totalorder %s70, %s71
    %p82 = scmp.eq.s32.totalorder %s20, 0
    %p83 = por %p81, %p82
    %p84 = scmp.ne.s32.totalorder %s70, %s71
    %p85 = scmp.eq.s32.totalorder %s21, 1
    %p86 = por %p84, %p85
    %p88 = scmp.ne.s32.totalorder %s71, %s87
    %p89 = scmp.eq.s32.totalorder %s21, 0
    %p90 = por %p88, %p89
    %s92 = sadd.s32 %s91, 1
    %p95 = scmp.eq.s32.totalorder %s15, 1
    %p96 = scmp.ne.s32.totalorder %s91, %s93
    %p97 = scmp.eq.s32.totalorder %s15, 0
    %p98 = por %p96, %p97
    %p99 = scmp.ne.s32.totalorder %s91, %s93
    %p100 = scmp.eq.s32.totalorder %s20, 1
    %p101 = por %p99, %p100
    %p102 = scmp.ne.s32.totalorder %s93, %s94
    %p103 = scmp.eq.s32.totalorder %s20, 0
    %p104 = por %p102, %p103
    %p105 = scmp.ne.s32.totalorder %s93, %s94
    %p106 = scmp.eq.s32.totalorder %s21, 1
    %p107 = por %p105, %p106
    %p109 = scmp.ne.s32.totalorder %s94, %s108
    %p110 = scmp.eq.s32.totalorder %s21, 0
    %p111 = por %p109, %p110
    %s113 = sadd.s32 %s112, 1
    %p116 = scmp.eq.s32.totalorder %s15, 1
    %p117 = scmp.ne.s32.totalorder %s112, %s114
    %p118 = scmp.eq.s32.totalorder %s15, 0
    %p119 = por %p117, %p118
    %p120 = scmp.ne.s32.totalorder %s112, %s114
    %p121 = scmp.eq.s32.totalorder %s20, 1
    %p122 = por %p120, %p121
    %p123 = scmp.ne.s32.totalorder %s114, %s115
    %p124 = scmp.eq.s32.totalorder %s20, 0
    %p125 = por %p123, %p124
    %p126 = scmp.ne.s32.totalorder %s114, %s115
    %p127 = scmp.eq.s32.totalorder %s21, 1
    %p128 = por %p126, %p127
    %p130 = scmp.ne.s32.totalorder %s115, %s129
    %p131 = scmp.eq.s32.totalorder %s21, 0
    %p132 = por %p130, %p131
    %s134 = sadd.s32 %s133, 1
    %p137 = scmp.eq.s32.totalorder %s15, 1
    %p138 = scmp.ne.s32.totalorder %s133, %s135
    %p139 = scmp.eq.s32.totalorder %s15, 0
    %p140 = por %p138, %p139
    %p141 = scmp.ne.s32.totalorder %s133, %s135
    %p142 = scmp.eq.s32.totalorder %s20, 1
    %p143 = por %p141, %p142
    %p144 = scmp.ne.s32.totalorder %s135, %s136
    %p145 = scmp.eq.s32.totalorder %s20, 0
    %p146 = por %p144, %p145
    %p147 = scmp.ne.s32.totalorder %s135, %s136
    %p148 = scmp.eq.s32.totalorder %s21, 1
    %p149 = por %p147, %p148
    %p151 = scmp.ne.s32.totalorder %s136, %s150
    %p152 = scmp.eq.s32.totalorder %s21, 0
    %p153 = por %p151, %p152
    %s155 = sadd.s32 %s154, 1
    %p158 = scmp.eq.s32.totalorder %s15, 1
    %p159 = scmp.ne.s32.totalorder %s154, %s156
    %p160 = scmp.eq.s32.totalorder %s15, 0
    %p161 = por %p159, %p160
    %p162 = scmp.ne.s32.totalorder %s154, %s156
    %p163 = scmp.eq.s32.totalorder %s20, 1
    %p164 = por %p162, %p163
    %p165 = scmp.ne.s32.totalorder %s156, %s157
    %p166 = scmp.eq.s32.totalorder %s20, 0
    %p167 = por %p165, %p166
    %p168 = scmp.ne.s32.totalorder %s156, %s157
    %p169 = scmp.eq.s32.totalorder %s21, 1
    %p170 = por %p168, %p169
    %p172 = scmp.ne.s32.totalorder %s157, %s171
    %p173 = scmp.eq.s32.totalorder %s21, 0
    %p174 = por %p172, %p173
    %s176 = sadd.s32 %s175, 1
    %p179 = scmp.eq.s32.totalorder %s15, 1
    %p180 = scmp.ne.s32.totalorder %s175, %s177
    %p181 = scmp.eq.s32.totalorder %s15, 0
    %p182 = por %p180, %p181
    %p183 = scmp.ne.s32.totalorder %s175, %s177
    %p184 = scmp.eq.s32.totalorder %s20, 1
    %p185 = por %p183, %p184
    %p186 = scmp.ne.s32.totalorder %s177, %s178
    %p187 = scmp.eq.s32.totalorder %s20, 0
    %p188 = por %p186, %p187
    %p189 = scmp.ne.s32.totalorder %s177, %s178
    %p190 = scmp.eq.s32.totalorder %s21, 1
    %p191 = por %p189, %p190
    %p193 = scmp.ne.s32.totalorder %s178, %s192
    %p194 = scmp.eq.s32.totalorder %s21, 0
    %p195 = por %p193, %p194
    %s196 = ssub.s32 %s22, %s34
    %s197 = ssub.s32 %s23, %s30
    %s198 = sor.u32 %s196, %s197
    %p199 = scmp.eq.s32.totalorder %s198, 0
    %s201 = sadd.s32 %s200, 1
    %s202 = scalar_select %p199, %s200, %s201
    %p205 = pneg %p199
    %p206 = scmp.eq.s32.totalorder %s15, 1
    %p207 = por %p205, %p206
    %p208 = scmp.ne.s32.totalorder %s200, %s203
    %p209 = scmp.eq.s32.totalorder %s15, 0
    %p210 = por %p208, %p209
    %p211 = scmp.ne.s32.totalorder %s200, %s203
    %p212 = scmp.eq.s32.totalorder %s20, 1
    %p213 = por %p211, %p212
    %p214 = scmp.ne.s32.totalorder %s203, %s204
    %p215 = scmp.eq.s32.totalorder %s20, 0
    %p216 = por %p214, %p215
    %p217 = scmp.ne.s32.totalorder %s203, %s204
    %p218 = scmp.eq.s32.totalorder %s21, 1
    %p219 = por %p217, %p218
    %p221 = scmp.ne.s32.totalorder %s204, %s220
    %p222 = scmp.eq.s32.totalorder %s21, 0
    %p223 = por %p221, %p222
    %p224 = scmp.le.s32.totalorder 1, %s15
    %p225 = scmp.lt.s32.totalorder %s15, 3
    %p226 = pnand %p224, %p225
    %p227 = pneg %p226
    // Predicated region
    $region9: #{attention_block_forward.1} parent=5 // pred_check
      _
    $region10: #{attention_block_forward.1} parent=5 // pred_check_branch
      %229 = sbr.rel (%p226) target = $region12
    $region11: #{attention_block_forward.1} parent=5 // pred_region
      %s230 = ssub.s32 %s15, 1
      // Predicated region
      $region13: #{attention_block_forward.1} parent=11 // pred_check
        %p231 = pneg %p104
      $region14: #{attention_block_forward.1} parent=11 // pred_check_branch
        %233 = sbr.rel (%p231) target = $region16
      $region15: #{attention_block_forward.1} parent=11 // pred_region
        _
      $region16: #{attention_block_forward.1} parent=11 // pred_fallthru
        _
      // Predicated region
      $region17: #{attention_block_forward.1} parent=11 // pred_check
        %p234 = pneg %p125
      $region18: #{attention_block_forward.1} parent=11 // pred_check_branch
        %236 = sbr.rel (%p234) target = $region20
      $region19: #{attention_block_forward.1} parent=11 // pred_region
        _
      $region20: #{attention_block_forward.1} parent=11 // pred_fallthru
        _
      // Predicated region
      $region21: #{attention_block_forward.1} parent=11 // pred_check
        %p237 = pneg %p146
      $region22: #{attention_block_forward.1} parent=11 // pred_check_branch
        %239 = sbr.rel (%p237) target = $region24
      $region23: #{attention_block_forward.1} parent=11 // pred_region
        _
      $region24: #{attention_block_forward.1} parent=11 // pred_fallthru
        _
      // Predicated region
      $region25: #{attention_block_forward.1} parent=11 // pred_check
        %p240 = pneg %p167
      $region26: #{attention_block_forward.1} parent=11 // pred_check_branch
        %242 = sbr.rel (%p240) target = $region28
      $region27: #{attention_block_forward.1} parent=11 // pred_region
        _
      $region28: #{attention_block_forward.1} parent=11 // pred_fallthru
        _
      // Predicated region
      $region29: #{attention_block_forward.1} parent=11 // pred_check
        %p243 = pneg %p188
      $region30: #{attention_block_forward.1} parent=11 // pred_check_branch
        %245 = sbr.rel (%p243) target = $region32
      $region31: #{attention_block_forward.1} parent=11 // pred_region
        _
      $region32: #{attention_block_forward.1} parent=11 // pred_fallthru
        _
    $region12: #{attention_block_forward.1} parent=5 // pred_fallthru
      _
    %p246 = scmp.lt.s32.totalorder %s15, 2
    // Predicated region
    $region33: #{attention_block_forward.1} parent=5 // pred_check
      %p247 = pneg %p246
    $region34: #{attention_block_forward.1} parent=5 // pred_check_branch
      %249 = sbr.rel (%p247) target = $region36
    $region35: #{attention_block_forward.1} parent=5 // pred_region
      // Predicated region
      $region37: #{attention_block_forward.1} parent=35 // pred_check
        %p250 = pneg %p49
      $region38: #{attention_block_forward.1} parent=35 // pred_check_branch
        %252 = sbr.rel (%p250) target = $region40
      $region39: #{attention_block_forward.1} parent=35 // pred_region
        %s253 = smul.u32 2, %s23
        %p254 = scmp.lt.s32.totalorder %s22, 1
        %s255 = scalar_select %p254, %s22, 1
        %p256 = scmp.lt.s32.totalorder %s253, 1
        %s257 = scalar_select %p256, %s253, 1
        %s258 = smul.addr %s255, 2
        %s259 = sadd.s32 %s257, %s258
        %s260 = smul.addr %s259, 4
        %s261 = scalar_lea.vmem %s0, %s260
        %s262 = smul.u32 2, %s23
      $region40: #{attention_block_forward.1} parent=35 // pred_fallthru
        _
      // Predicated region
      $region41: #{attention_block_forward.1} parent=35 // pred_check
        %p263 = pneg %p77
      $region42: #{attention_block_forward.1} parent=35 // pred_check_branch
        %265 = sbr.rel (%p263) target = $region44
      $region43: #{attention_block_forward.1} parent=35 // pred_region
        %s266 = smul.u32 2, %s23
        %p267 = scmp.lt.s32.totalorder %s22, 1
        %s268 = scalar_select %p267, %s22, 1
        %p269 = scmp.lt.s32.totalorder %s266, 1
        %s270 = scalar_select %p269, %s266, 1
        %s271 = smul.addr %s268, 2
        %s272 = sadd.s32 %s270, %s271
        %s273 = smul.addr %s272, 4
        %s274 = scalar_lea.vmem %s1, %s273
        %s275 = smul.u32 2, %s23
      $region44: #{attention_block_forward.1} parent=35 // pred_fallthru
        _
    $region36: #{attention_block_forward.1} parent=5 // pred_fallthru
      _
    %p276 = scmp.le.s32.totalorder 1, %s15
    %p277 = scmp.lt.s32.totalorder %s15, 3
    %p278 = pnand %p276, %p277
    %p279 = pneg %p278
    // Predicated region
    $region45: #{attention_block_forward.1} parent=5 // pred_check
      _
    $region46: #{attention_block_forward.1} parent=5 // pred_check_branch
      %281 = sbr.rel (%p278) target = $region48
    $region47: #{attention_block_forward.1} parent=5 // pred_region
      %s282 = ssub.s32 %s15, 1
      %s283 = smul.u32 2, %s25
      %p284 = scmp.lt.s32.totalorder %s24, 1
      %s285 = scalar_select %p284, %s24, 1
      %p286 = scmp.lt.s32.totalorder %s283, 1
      %s287 = scalar_select %p286, %s283, 1
      %s288 = smul.addr %s285, 2
      %s289 = sadd.s32 %s287, %s288
      %s290 = smul.addr %s289, 4
      %s291 = scalar_lea.vmem %s0, %s290
      %p292 = pneg %p55
      %p293 = pneg %p52
      %s294 = smul.u32 2, %s25
      %p295 = scmp.lt.s32.totalorder %s24, 1
      %s296 = scalar_select %p295, %s24, 1
      %p297 = scmp.lt.s32.totalorder %s294, 1
      %s298 = scalar_select %p297, %s294, 1
      %s299 = smul.addr %s296, 2
      %s300 = sadd.s32 %s298, %s299
      %s301 = smul.addr %s300, 4
      %s302 = scalar_lea.vmem %s1, %s301
      %p303 = pneg %p83
      %p304 = pneg %p80
      %p305 = pneg %p104
      %p306 = pneg %p101
      %p307 = pneg %p125
      %p308 = pneg %p122
      %p309 = pneg %p146
      %p310 = pneg %p143
      %p311 = pneg %p167
      %p312 = pneg %p164
      %p313 = pneg %p188
      %p314 = pneg %p185
      %p315 = pneg %p216
      %p316 = pneg %p213
      %s317 = smul.u32 2, %s25
      %p318 = scmp.lt.s32.totalorder %s24, 1
      %s319 = scalar_select %p318, %s24, 1
      %p320 = scmp.lt.s32.totalorder %s317, 1
      %s321 = scalar_select %p320, %s317, 1
      %s322 = smul.addr %s319, 2
      %s323 = sadd.s32 %s321, %s322
      %s324 = smul.addr %s323, 4
      %s325 = scalar_lea.vmem %s7, %s324
      %s326 = smul.u32 2, %s25
      %p327 = scmp.lt.s32.totalorder %s24, 1
      %s328 = scalar_select %p327, %s24, 1
      %p329 = scmp.lt.s32.totalorder %s326, 1
      %s330 = scalar_select %p329, %s326, 1
      %s331 = smul.addr %s328, 2
      %s332 = sadd.s32 %s330, %s331
      %s333 = smul.addr %s332, 4
      %s334 = scalar_lea.vmem %s0, %s333
      %s335 = smul.u32 2, %s25
      %s336 = smul.u32 2, %s25
      %p337 = scmp.lt.s32.totalorder %s24, 1
      %s338 = scalar_select %p337, %s24, 1
      %p339 = scmp.lt.s32.totalorder %s336, 1
      %s340 = scalar_select %p339, %s336, 1
      %s341 = smul.addr %s338, 2
      %s342 = sadd.s32 %s340, %s341
      %s343 = smul.addr %s342, 4
      %s344 = scalar_lea.vmem %s1, %s343
      %s345 = smul.u32 2, %s25
      %s346 = smul.u32 2, %s25
      %p347 = scmp.lt.s32.totalorder %s24, 1
      %s348 = scalar_select %p347, %s24, 1
      %p349 = scmp.lt.s32.totalorder %s346, 1
      %s350 = scalar_select %p349, %s346, 1
      %s351 = smul.addr %s348, 2
      %s352 = sadd.s32 %s350, %s351
      %s353 = smul.addr %s352, 4
      %s354 = scalar_lea.vmem %s7, %s353
      %s355 = smul.u32 2, %s25
      %v357 = vld [vmem:[%s2] sm:$0x3]
      %v358 = vld [vmem:[%s3] sm:$0x3]
      %v359 = vld [vmem:[%s5] sm:$0x1]
      %v360 = vld [vmem:[%s4] sm:$0xf]
      %v361 = vld [vmem:[#allocation2] sm:$0x1]
      %v362 = vld [vmem:[%s334] sm:$0xff]
      %v363 = vld [vmem:[%s344] sm:$0xff]
      %v365 = vunpack.c.l.b16 %v363
      %v366 = vunpack.c.h.b16 %v363
      %v367 = vpack.c.b16 %v365, %v365
      %v368 = vpack.c.b16 %v366, %v366
      %vm369 = vcmask 64512
      %v371 = vsel %vm369, %v358, 0
      %vm373 = vcmask 1043456
      %v375 = vsel %vm373, %v367, 0
      %v378 = vsel %vm373, %v368, 0
      %380 = vmatprep.subr.bf16.mxu0 0
      %381 = vmatpush1.bf16.msra.mxu0 0
      %382 = vmatprep.subr.bf16.mxu0 0
      %383 = vmatpush1.bf16.msra.mxu0 0
      %384 = vmatprep.subr.bf16.mxu0 0
      %385 = vmatpush1.bf16.msra.mxu0 0
      %386 = vmatprep.subr.bf16.mxu0 0
      %387 = vmatpush1.bf16.msra.mxu0 0
      %388 = vmatprep.subr.bf16.mxu0 0
      %389 = vmatpush1.bf16.msra.mxu0 0
      %390 = vmatprep.subr.bf16.mxu0 0
      %391 = vmatpush1.bf16.msra.mxu0 0
      %392 = vmatprep.subr.bf16.mxu0 0
      %393 = vmatpush1.bf16.msra.mxu0 0
      %394 = vmatprep.subr.bf16.mxu0 %v378
      %395 = vmatpush1.bf16.msra.mxu0 %v375
      %396 = vmatprep.subr.bf16.mxu0 0
      %397 = vmatpush2.bf16.msra.mxu0 0
      %398 = vmatprep.subr.bf16.mxu0 0
      %399 = vmatpush2.bf16.msra.mxu0 0
      %400 = vmatprep.subr.bf16.mxu0 0
      %401 = vmatpush2.bf16.msra.mxu0 0
      %402 = vmatprep.subr.bf16.mxu0 0
      %403 = vmatpush2.bf16.msra.mxu0 0
      %404 = vmatprep.subr.bf16.mxu0 0
      %405 = vmatpush2.bf16.msra.mxu0 0
      %406 = vmatprep.subr.bf16.mxu0 0
      %407 = vmatpush2.bf16.msra.mxu0 0
      %408 = vmatprep.subr.bf16.mxu0 0
      %409 = vmatpush2.bf16.msra.mxu0 0
      %410 = vmatprep.subr.bf16.mxu0 0
      %411 = vmatpush2.bf16.msra.mxu0 0
      %412 = vmatprep.mubr.bf16.mxu0 0
      %413 = vmatmul.mubr.bf16.gmra.mxu0 %v371
      %v414 = vpop.f32.mrf.mxu0
      %v415 = vadd.f32 0.0, %v414
      %v416 = vpop.f32.mrf.mxu0
      %v417 = vadd.f32 0.0, %v416
      %v418 = vpop.f32.mrf.mxu0
      %v419 = vpop.f32.mrf.mxu0
      %420 = vdwg.mxu0
      %v422 = vunpack.c.l.b16 %v362
      %v423 = vunpack.c.h.b16 %v362
      %v424 = vpack.c.b16 %v422, %v422
      %v425 = vpack.c.b16 %v423, %v423
      %v427 = vsel %vm369, %v357, 0
      %v430 = vsel %vm373, %v424, 0
      %v433 = vsel %vm373, %v425, 0
      %435 = vmatprep.subr.bf16.mxu0 0
      %436 = vmatpush1.bf16.msra.mxu0 0
      %437 = vmatprep.subr.bf16.mxu0 0
      %438 = vmatpush1.bf16.msra.mxu0 0
      %439 = vmatprep.subr.bf16.mxu0 0
      %440 = vmatpush1.bf16.msra.mxu0 0
      %441 = vmatprep.subr.bf16.mxu0 0
      %442 = vmatpush1.bf16.msra.mxu0 0
      %443 = vmatprep.subr.bf16.mxu0 0
      %444 = vmatpush1.bf16.msra.mxu0 0
      %445 = vmatprep.subr.bf16.mxu0 0
      %446 = vmatpush1.bf16.msra.mxu0 0
      %447 = vmatprep.subr.bf16.mxu0 0
      %448 = vmatpush1.bf16.msra.mxu0 0
      %449 = vmatprep.subr.bf16.mxu0 %v433
      %450 = vmatpush1.bf16.msra.mxu0 %v430
      %451 = vmatprep.subr.bf16.mxu0 0
      %452 = vmatpush2.bf16.msra.mxu0 0
      %453 = vmatprep.subr.bf16.mxu0 0
      %454 = vmatpush2.bf16.msra.mxu0 0
      %455 = vmatprep.subr.bf16.mxu0 0
      %456 = vmatpush2.bf16.msra.mxu0 0
      %457 = vmatprep.subr.bf16.mxu0 0
      %458 = vmatpush2.bf16.msra.mxu0 0
      %459 = vmatprep.subr.bf16.mxu0 0
      %460 = vmatpush2.bf16.msra.mxu0 0
      %461 = vmatprep.subr.bf16.mxu0 0
      %462 = vmatpush2.bf16.msra.mxu0 0
      %463 = vmatprep.subr.bf16.mxu0 0
      %464 = vmatpush2.bf16.msra.mxu0 0
      %465 = vmatprep.subr.bf16.mxu0 0
      %466 = vmatpush2.bf16.msra.mxu0 0
      %467 = vmatprep.mubr.bf16.mxu0 0
      %468 = vmatmul.mubr.bf16.gmra.mxu0 %v427
      %v469 = vpop.f32.mrf.mxu0
      %v470 = vadd.f32 %v415, %v469
      %v471 = vpop.f32.mrf.mxu0
      %v472 = vadd.f32 %v417, %v471
      %v473 = vpop.f32.mrf.mxu0
      %v474 = vpop.f32.mrf.mxu0
      %475 = vdwg.mxu0
      %477 = vset.pattern.permute.xlu0 0
      %478 = vperm.xlu0 %477, %v360
      %v479 = vpop.permute.xlu0 %478
      %v481 = vadd.f32 %v470, %v479
      %v482 = vadd.f32 %v472, %v479
      %v483 = vmax.f32 %v481, 0.0
      %v484 = vmax.f32 %v482, 0.0
      %v485 = vpack.c.bf16 %v483, %v483
      %v486 = vpack.c.bf16 %v484, %v484
      %488 = vset.pattern.permute.xlu0 0
      %489 = vperm.xlu0 %488, %v361
      %v490 = vpop.permute.xlu0 %489
      %v492 = vlaneseq
      %v493 = vshrl.u32 %v492, 7
      %v494 = vsub.s32 0, %v493
      %v495 = vrot.slane %v490, %v494
      %vm496 = vcmask 31744
      %v498 = vsel %vm496, %v359, 0
      %vm500 = vcmask 1041408
      %v502 = vsel %vm500, %v485, 0
      %v505 = vsel %vm500, %v486, 0
      %507 = vmatprep.subr.bf16.mxu0 0
      %508 = vmatpush1.bf16.msra.mxu0 0
      %509 = vmatprep.subr.bf16.mxu0 0
      %510 = vmatpush1.bf16.msra.mxu0 0
      %511 = vmatprep.subr.bf16.mxu0 0
      %512 = vmatpush1.bf16.msra.mxu0 0
      %513 = vmatprep.subr.bf16.mxu0 0
      %514 = vmatpush1.bf16.msra.mxu0 0
      %515 = vmatprep.subr.bf16.mxu0 0
      %516 = vmatpush1.bf16.msra.mxu0 0
      %517 = vmatprep.subr.bf16.mxu0 0
      %518 = vmatpush1.bf16.msra.mxu0 0
      %519 = vmatprep.subr.bf16.mxu0 0
      %520 = vmatpush1.bf16.msra.mxu0 0
      %521 = vmatprep.subr.bf16.mxu0 %v505
      %522 = vmatpush1.bf16.msra.mxu0 %v502
      %523 = vmatprep.subr.bf16.mxu0 0
      %524 = vmatpush2.bf16.msra.mxu0 0
      %525 = vmatprep.subr.bf16.mxu0 0
      %526 = vmatpush2.bf16.msra.mxu0 0
      %527 = vmatprep.subr.bf16.mxu0 0
      %528 = vmatpush2.bf16.msra.mxu0 0
      %529 = vmatprep.subr.bf16.mxu0 0
      %530 = vmatpush2.bf16.msra.mxu0 0
      %531 = vmatprep.subr.bf16.mxu0 0
      %532 = vmatpush2.bf16.msra.mxu0 0
      %533 = vmatprep.subr.bf16.mxu0 0
      %534 = vmatpush2.bf16.msra.mxu0 0
      %535 = vmatprep.subr.bf16.mxu0 0
      %536 = vmatpush2.bf16.msra.mxu0 0
      %537 = vmatprep.subr.bf16.mxu0 0
      %538 = vmatpush2.bf16.msra.mxu0 0
      %539 = vmatprep.mubr.bf16.mxu0 0
      %540 = vmatmul.mubr.bf16.gmra.mxu0 %v498
      %v541 = vpop.f32.mrf.mxu0
      %v542 = vadd.f32 %v495, %v541
      %v543 = vpop.f32.mrf.mxu0
      %v544 = vadd.f32 %v495, %v543
      %v545 = vpop.f32.mrf.mxu0
      %v546 = vpop.f32.mrf.mxu0
      %547 = vdwg.mxu0
      %v548 = vxor.u32 %v542, 2147483648
      %v549 = vxor.u32 %v544, 2147483648
      %v550 = vmul.f32 %v548, 1.442695
      %v551 = vpow.pop %v550
      %v552 = vmul.f32 %v549, 1.442695
      %v553 = vpow.pop %v552
      %v554 = vadd.f32 %v551, 1.0
      %v555 = vadd.f32 %v553, 1.0
      %v556 = vrcp.pop %v554
      %v557 = vmul.f32 1.0, %v556
      %v558 = vrcp.pop %v555
      %v559 = vmul.f32 1.0, %v558
      %v560 = vunpack.c.l.bf16 %v363
      %v561 = vunpack.c.h.bf16 %v363
      %v562 = vlaneseq
      %v563 = vshrl.u32 %v562, 7
      %v564 = vsub.s32 0, %v563
      %v565 = vrot.slane %v557, %v564
      %v566 = vlaneseq
      %v567 = vshrl.u32 %v566, 7
      %v568 = vsub.s32 0, %v567
      %v569 = vrot.slane %v559, %v568
      %v570 = vmul.f32 %v560, %v565
      %v571 = vmul.f32 %v561, %v569
      %v572 = vpack.c.bf16 %v570, %v570
      %v573 = vpack.c.bf16 %v571, %v571
      %v576 = vunpack.c.l.b16 %v572
      %v577 = vunpack.c.l.b16 %v573
      %v578 = vpack.c.b16 %v577, %v576
      %580 = vst [vmem:[%s354] sm:$0xff] %v578
      %s581 = smul.u32 2, %s25
      %p582 = scmp.lt.s32.totalorder %s24, 1
      %s583 = scalar_select %p582, %s24, 1
      %p584 = scmp.lt.s32.totalorder %s581, 1
      %s585 = scalar_select %p584, %s581, 1
      %s586 = smul.addr %s583, 2
      %s587 = sadd.s32 %s585, %s586
      %s588 = smul.addr %s587, 4
      %s589 = scalar_lea.vmem %s7, %s588
      // Predicated region
      $region49: #{attention_block_forward.1} parent=47 // pred_check
        %p590 = pneg %p213
      $region50: #{attention_block_forward.1} parent=47 // pred_check_branch
        %592 = sbr.rel (%p590) target = $region52
      $region51: #{attention_block_forward.1} parent=47 // pred_region
        %s593 = smul.u32 2, %s25
      $region52: #{attention_block_forward.1} parent=47 // pred_fallthru
        _
    $region48: #{attention_block_forward.1} parent=5 // pred_fallthru
      _
    %p594 = scmp.le.s32.totalorder 2, %s15
    // Predicated region
    $region53: #{attention_block_forward.1} parent=5 // pred_check
      %p595 = pneg %p594
    $region54: #{attention_block_forward.1} parent=5 // pred_check_branch
      %597 = sbr.rel (%p595) target = $region56
    $region55: #{attention_block_forward.1} parent=5 // pred_region
      %s598 = ssub.s32 %s15, 2
      // Predicated region
      $region57: #{attention_block_forward.1} parent=55 // pred_check
        %p599 = pneg %p219
      $region58: #{attention_block_forward.1} parent=55 // pred_check_branch
        %601 = sbr.rel (%p599) target = $region60
      $region59: #{attention_block_forward.1} parent=55 // pred_region
        %s602 = smul.u32 2, %s27
        %p603 = scmp.lt.s32.totalorder %s26, 1
        %s604 = scalar_select %p603, %s26, 1
        %p605 = scmp.lt.s32.totalorder %s602, 1
        %s606 = scalar_select %p605, %s602, 1
        %s607 = smul.addr %s604, 2
        %s608 = sadd.s32 %s606, %s607
        %s609 = smul.addr %s608, 4
        %s610 = scalar_lea.vmem %s7, %s609
      $region60: #{attention_block_forward.1} parent=55 // pred_fallthru
        _
    $region56: #{attention_block_forward.1} parent=5 // pred_fallthru
      _
  $region6: #{attention_block_forward.1} parent=0 // loop_footer
    %s19 = sadd.s32 1, %s15
  $region7: #{attention_block_forward.1} parent=0 // loop_footer_branch
    %14 = sbr.rel target = $region3
  $region8: #{attention_block_forward.1} parent=0 // loop_exit
    _

</llo_original>
